<compile_context>
chip_gen: v6e
topology: v6e:2x2x1
jax: 0.10.0
libtpu: 0.0.40
codegen_flags: <defaults>
</compile_context>

<pallas_src>
import functools

import jax
import jax.numpy as jnp
from jax.experimental import pallas as pl
from jax.experimental.pallas import tpu as pltpu


def _round_up(n, m):
    return ((n + m - 1) // m) * m


def _pad2(a, rows, cols):
    return jnp.pad(a, ((0, rows - a.shape[0]), (0, cols - a.shape[1])))


def _mc_kernel(
    x_ref, mem_ref,
    w_emb, b_emb,
    w_x3, b_x3,        # fused reset|update|select x-side weights: [I, 3*Hp]
    w_m2, b_m2,        # fused reset|update memory-side weights:  [Hp, 2*Hp]
    w_sm, b_sm,        # select_gate_m (needs R*memory, kept separate)
    w_o, b_o,
    out_ref,
    *, hid_p,
):
    w_emb_v = w_emb[...]
    cdt = w_emb_v.dtype  # MXU input dtype (f32 or bf16); accumulation is f32.

    x = x_ref[...].astype(cdt)
    m_in = mem_ref[...].astype(cdt)

    # memory = relu(embedding(memory))   (kept in f32 for the elementwise math)
    memory = jnp.maximum(
        jnp.dot(m_in, w_emb_v, preferred_element_type=jnp.float32) + b_emb[...],
        0.0,
    )

    # Fused x-side gates: [B, 3*Hp] = x @ (w_rx | w_ux | w_sx) + biases
    gx = jnp.dot(x, w_x3[...], preferred_element_type=jnp.float32) + b_x3[...]
    # Fused memory-side gates: [B, 2*Hp] = memory @ (w_rm | w_um) + biases
    gm = (
        jnp.dot(memory.astype(cdt), w_m2[...], preferred_element_type=jnp.float32)
        + b_m2[...]
    )

    # Gate naming mirrors the PyTorch module: Z comes from the "reset_gate"
    # weights but is used as the interpolation gate, R from "update_gate".
    Z = jax.nn.sigmoid(gx[:, 0:hid_p] + gm[:, 0:hid_p])
    R = jax.nn.sigmoid(gx[:, hid_p:2 * hid_p] + gm[:, hid_p:2 * hid_p])

    # m_tilda = tanh(select_gate_x(x) + select_gate_m(R * memory))
    s_pre = (
        gx[:, 2 * hid_p:3 * hid_p]
        + jnp.dot((R * memory).astype(cdt), w_sm[...],
                  preferred_element_type=jnp.float32)
        + b_sm[...]
    )
    m_tilda = jnp.tanh(s_pre)

    # H = Z*memory + (1-Z)*m_tilda, rewritten to save a VPU multiply.
    H = m_tilda + Z * (memory - m_tilda)

    out_ref[...] = (
        jnp.dot(H.astype(cdt), w_o[...], preferred_element_type=jnp.float32)
        + b_o[...]
    ).astype(out_ref.dtype)


def prepare_params(params, compute_dtype=jnp.float32):
    """Pad feature dims to multiples of 128, fuse gate weights, cast weights.

    `params` holds the natural (already [in, out]-transposed) Linear params.
    Biases stay f32 regardless of compute_dtype (they are added to f32 accums).
    """
    emb_size, emb_f = params["w_emb"].shape
    in_f, hid_f = params["w_rx"].shape
    hid_f2, out_f = params["w_o"].shape
    assert emb_f == hid_f, "MCLayer forward requires emb_features == hid_features"
    assert hid_f2 == hid_f

    E = _round_up(emb_size, 128)
    I = _round_up(in_f, 128)
    Hp = _round_up(hid_f, 128)
    O = _round_up(out_f, 128)

    wdt = compute_dtype
    f32 = jnp.float32

    prepared = dict(
        w_emb=_pad2(params["w_emb"], E, Hp).astype(wdt),
        b_emb=_pad2(params["b_emb"], 1, Hp).astype(f32),
        w_x3=jnp.concatenate(
            [_pad2(params["w_rx"], I, Hp),
             _pad2(params["w_ux"], I, Hp),
             _pad2(params["w_sx"], I, Hp)], axis=1).astype(wdt),
        b_x3=jnp.concatenate(
            [_pad2(params["b_rx"], 1, Hp),
             _pad2(params["b_ux"], 1, Hp),
             _pad2(params["b_sx"], 1, Hp)], axis=1).astype(f32),
        w_m2=jnp.concatenate(
            [_pad2(params["w_rm"], Hp, Hp),
             _pad2(params["w_um"], Hp, Hp)], axis=1).astype(wdt),
        b_m2=jnp.concatenate(
            [_pad2(params["b_rm"], 1, Hp),
             _pad2(params["b_um"], 1, Hp)], axis=1).astype(f32),
        w_sm=_pad2(params["w_sm"], Hp, Hp).astype(wdt),
        b_sm=_pad2(params["b_sm"], 1, Hp).astype(f32),
        w_o=_pad2(params["w_o"], Hp, O).astype(wdt),
        b_o=_pad2(params["b_o"], 1, O).astype(f32),
    )
    meta = dict(embedding_size=emb_size, in_features=in_f, hid_features=hid_f,
                out_features=out_f, E=E, I=I, Hp=Hp, O=O)
    return prepared, meta


def mc_layer_forward(x, memory, prepared, meta, *, block_b=256):
    """x: [B, in_features], memory: [B, embedding_size] -> [B, out_features]."""
    B = x.shape[0]
    assert x.shape[1] == meta["in_features"]
    assert memory.shape[1] == meta["embedding_size"]

    I, E, Hp, O = meta["I"], meta["E"], meta["Hp"], meta["O"]

    # Batch tile: multiple of 8 (sublane alignment), capped at block_b.
    TB = min(_round_up(B, 8), block_b)
    Bp = _round_up(B, TB)

    xp = jnp.pad(x.astype(jnp.float32), ((0, Bp - B), (0, I - x.shape[1])))
    mp = jnp.pad(memory.astype(jnp.float32),
                 ((0, Bp - B), (0, E - memory.shape[1])))

    p = prepared
    grid = (pl.cdiv(Bp, TB),)

    def batch_map(i):
        return (i, 0)

    def const_map(i):
        return (0, 0)

    kernel = functools.partial(_mc_kernel, hid_p=Hp)

    # Advisory cost hint for XLA's scheduler.
    flops = 2 * Bp * (E * Hp + 3 * I * Hp + 2 * Hp * Hp + Hp * Hp + Hp * O)
    transcendentals = 3 * Bp * Hp
    weight_bytes = sum(int(v.size) * v.dtype.itemsize for v in p.values())
    bytes_accessed = int(xp.size * 4 + mp.size * 4 + Bp * O * 4 + weight_bytes)

    out = pl.pallas_call(
        kernel,
        out_shape=jax.ShapeDtypeStruct((Bp, O), jnp.float32),
        grid_spec=pltpu.PrefetchScalarGridSpec(
            num_scalar_prefetch=0,
            grid=grid,
            in_specs=[
                pl.BlockSpec((TB, I), batch_map),
                pl.BlockSpec((TB, E), batch_map),
                pl.BlockSpec(p["w_emb"].shape, const_map),
                pl.BlockSpec(p["b_emb"].shape, const_map),
                pl.BlockSpec(p["w_x3"].shape, const_map),
                pl.BlockSpec(p["b_x3"].shape, const_map),
                pl.BlockSpec(p["w_m2"].shape, const_map),
                pl.BlockSpec(p["b_m2"].shape, const_map),
                pl.BlockSpec(p["w_sm"].shape, const_map),
                pl.BlockSpec(p["b_sm"].shape, const_map),
                pl.BlockSpec(p["w_o"].shape, const_map),
                pl.BlockSpec(p["b_o"].shape, const_map),
            ],
            out_specs=pl.BlockSpec((TB, O), batch_map),
        ),
        compiler_params=pltpu.CompilerParams(
            dimension_semantics=("parallel",),  # batch tiles split across TCs on v7x
        ),
        cost_estimate=pl.CostEstimate(
            flops=flops,
            transcendentals=transcendentals,
            bytes_accessed=bytes_accessed,
        ),
    )(
        xp, mp,
        p["w_emb"], p["b_emb"],
        p["w_x3"], p["b_x3"],
        p["w_m2"], p["b_m2"],
        p["w_sm"], p["b_sm"],
        p["w_o"], p["b_o"],
    )

    return out[:B, :meta["out_features"]]


def init_params(key, embedding_size, in_features, emb_features, hid_features,
                out_features):
    """Deterministic synthetic params. Weights stored as [in, out] (pre-transposed)."""
    ks = jax.random.split(key, 16)

    def lin(kw, kb, fan_in, fan_out):
        bound = 1.0 / jnp.sqrt(fan_in)
        w = jax.random.uniform(kw, (fan_in, fan_out), jnp.float32, -bound, bound)
        b = jax.random.uniform(kb, (1, fan_out), jnp.float32, -bound, bound)
        return w, b

    p = {}
    p["w_emb"], p["b_emb"] = lin(ks[0], ks[1], embedding_size, emb_features)
    p["w_rx"], p["b_rx"] = lin(ks[2], ks[3], in_features, hid_features)
    p["w_rm"], p["b_rm"] = lin(ks[4], ks[5], emb_features, hid_features)
    p["w_ux"], p["b_ux"] = lin(ks[6], ks[7], in_features, hid_features)
    p["w_um"], p["b_um"] = lin(ks[8], ks[9], emb_features, hid_features)
    p["w_sx"], p["b_sx"] = lin(ks[10], ks[11], in_features, hid_features)
    p["w_sm"], p["b_sm"] = lin(ks[12], ks[13], emb_features, hid_features)
    p["w_o"], p["b_o"] = lin(ks[14], ks[15], hid_features, out_features)
    return p


def mc_layer_ref(x, memory, params):
    """Pure-JAX reference (mirrors the PyTorch forward)."""
    m = jnp.maximum(memory @ params["w_emb"] + params["b_emb"], 0.0)
    Z = jax.nn.sigmoid(x @ params["w_rx"] + params["b_rx"]
                       + m @ params["w_rm"] + params["b_rm"])
    R = jax.nn.sigmoid(x @ params["w_ux"] + params["b_ux"]
                       + m @ params["w_um"] + params["b_um"])
    m_tilda = jnp.tanh(x @ params["w_sx"] + params["b_sx"]
                       + (R * m) @ params["w_sm"] + params["b_sm"])
    H = Z * m + (1.0 - Z) * m_tilda
    return H @ params["w_o"] + params["b_o"]


if __name__ == "__main__":
    # Small shapes consistent with the module.
    batch = 8
    embedding_size = 32
    in_features = 16
    emb_features = 32   # must equal hid_features (Z * memory broadcast in torch forward)
    hid_features = 32
    out_features = 16

    key = jax.random.PRNGKey(0)
    kx, km, kp = jax.random.split(key, 3)
    x = jax.random.normal(kx, (batch, in_features), jnp.float32)
    memory = jax.random.normal(km, (batch, embedding_size), jnp.float32)
    params = init_params(kp, embedding_size, in_features, emb_features,
                         hid_features, out_features)

    ref = mc_layer_ref(x, memory, params)

    # f32 weights: tight check against the pure-JAX reference.
    prep_f32, meta = prepare_params(params, compute_dtype=jnp.float32)
    out_f32 = jax.block_until_ready(mc_layer_forward(x, memory, prep_f32, meta))
    assert out_f32.shape == (batch, out_features)
    assert jnp.allclose(out_f32, ref, atol=1e-4, rtol=1e-4), \
        "f32 kernel mismatch vs pure-JAX reference"

    # bf16 weights (halved HBM/VMEM weight traffic, bf16-native MXU): loose check.
    prep_bf16, meta_bf16 = prepare_params(params, compute_dtype=jnp.bfloat16)
    out_bf16 = jax.block_until_ready(mc_layer_forward(x, memory, prep_bf16, meta_bf16))
    assert out_bf16.shape == (batch, out_features)
    assert jnp.allclose(out_bf16, ref, atol=1e-1, rtol=1e-1), \
        "bf16 kernel mismatch vs pure-JAX reference"

    print("KERNEL_OK")
</pallas_src>

<mosaic_0001>
module attributes {stable_mosaic.version = 11 : i64} {
  func.func @_mc_kernel(%arg0: i32, %arg1: memref<8x128xf32, #tpu.memory_space<vmem>>, %arg2: memref<8x128xf32, #tpu.memory_space<vmem>>, %arg3: memref<128x128xf32, #tpu.memory_space<vmem>>, %arg4: memref<1x128xf32, #tpu.memory_space<vmem>>, %arg5: memref<128x384xf32, #tpu.memory_space<vmem>>, %arg6: memref<1x384xf32, #tpu.memory_space<vmem>>, %arg7: memref<128x256xf32, #tpu.memory_space<vmem>>, %arg8: memref<1x256xf32, #tpu.memory_space<vmem>>, %arg9: memref<128x128xf32, #tpu.memory_space<vmem>>, %arg10: memref<1x128xf32, #tpu.memory_space<vmem>>, %arg11: memref<128x128xf32, #tpu.memory_space<vmem>>, %arg12: memref<1x128xf32, #tpu.memory_space<vmem>>, %arg13: memref<8x128xf32, #tpu.memory_space<vmem>>) attributes {dimension_semantics = [#tpu.dimension_semantics<parallel>], iteration_bounds = array<i64: 1>, scalar_prefetch = 0 : i64, scratch_operands = 0 : i64, tpu.core_type = #tpu.core_type<tc>, window_params = [{transform_indices = @transform_0, window_bounds = array<i64: 8, 128>}, {transform_indices = @transform_1, window_bounds = array<i64: 8, 128>}, {pipeline_mode = #tpu.pipeline_mode<synchronous>, transform_indices = @transform_2, window_bounds = array<i64: 128, 128>}, {pipeline_mode = #tpu.pipeline_mode<synchronous>, transform_indices = @transform_3, window_bounds = array<i64: 1, 128>}, {pipeline_mode = #tpu.pipeline_mode<synchronous>, transform_indices = @transform_4, window_bounds = array<i64: 128, 384>}, {pipeline_mode = #tpu.pipeline_mode<synchronous>, transform_indices = @transform_5, window_bounds = array<i64: 1, 384>}, {pipeline_mode = #tpu.pipeline_mode<synchronous>, transform_indices = @transform_6, window_bounds = array<i64: 128, 256>}, {pipeline_mode = #tpu.pipeline_mode<synchronous>, transform_indices = @transform_7, window_bounds = array<i64: 1, 256>}, {pipeline_mode = #tpu.pipeline_mode<synchronous>, transform_indices = @transform_8, window_bounds = array<i64: 128, 128>}, {pipeline_mode = #tpu.pipeline_mode<synchronous>, transform_indices = @transform_9, window_bounds = array<i64: 1, 128>}, {pipeline_mode = #tpu.pipeline_mode<synchronous>, transform_indices = @transform_10, window_bounds = array<i64: 128, 128>}, {pipeline_mode = #tpu.pipeline_mode<synchronous>, transform_indices = @transform_11, window_bounds = array<i64: 1, 128>}, {transform_indices = @transform_12, window_bounds = array<i64: 8, 128>}]} {
    %c0 = arith.constant 0 : index
    %c0_0 = arith.constant 0 : index
    %0 = vector.load %arg3[%c0, %c0_0] : memref<128x128xf32, #tpu.memory_space<vmem>>, vector<128x128xf32>
    %c0_1 = arith.constant 0 : index
    %c0_2 = arith.constant 0 : index
    %1 = vector.load %arg1[%c0_1, %c0_2] : memref<8x128xf32, #tpu.memory_space<vmem>>, vector<8x128xf32>
    %c0_3 = arith.constant 0 : index
    %c0_4 = arith.constant 0 : index
    %2 = vector.load %arg2[%c0_3, %c0_4] : memref<8x128xf32, #tpu.memory_space<vmem>>, vector<8x128xf32>
    %cst = arith.constant dense<0.000000e+00> : vector<8x128xf32>
    %3 = tpu.matmul %2, %0, %cst {dimension_numbers = #tpu.dot_dimension_numbers<[1], [0], [0], [1], [0, 0, 1, 1], [], []>} : vector<8x128xf32>, vector<128x128xf32>, vector<8x128xf32> -> vector<8x128xf32>
    %c0_5 = arith.constant 0 : index
    %c0_6 = arith.constant 0 : index
    %4 = vector.load %arg4[%c0_5, %c0_6] : memref<1x128xf32, #tpu.memory_space<vmem>>, vector<1x128xf32>
    %5 = vector.broadcast %4 : vector<1x128xf32> to vector<8x128xf32>
    %6 = arith.addf %3, %5 : vector<8x128xf32>
    %cst_7 = arith.constant 0.000000e+00 : f32
    %7 = vector.broadcast %cst_7 : f32 to vector<8x128xf32>
    %8 = arith.maximumf %6, %7 : vector<8x128xf32>
    %c0_8 = arith.constant 0 : index
    %c0_9 = arith.constant 0 : index
    %9 = vector.load %arg5[%c0_8, %c0_9] : memref<128x384xf32, #tpu.memory_space<vmem>>, vector<128x384xf32>
    %cst_10 = arith.constant dense<0.000000e+00> : vector<8x384xf32>
    %10 = tpu.matmul %1, %9, %cst_10 {dimension_numbers = #tpu.dot_dimension_numbers<[1], [0], [0], [1], [0, 0, 1, 1], [], []>} : vector<8x128xf32>, vector<128x384xf32>, vector<8x384xf32> -> vector<8x384xf32>
    %c0_11 = arith.constant 0 : index
    %c0_12 = arith.constant 0 : index
    %11 = vector.load %arg6[%c0_11, %c0_12] : memref<1x384xf32, #tpu.memory_space<vmem>>, vector<1x384xf32>
    %12 = vector.broadcast %11 : vector<1x384xf32> to vector<8x384xf32>
    %13 = arith.addf %10, %12 : vector<8x384xf32>
    %c0_13 = arith.constant 0 : index
    %c0_14 = arith.constant 0 : index
    %14 = vector.load %arg7[%c0_13, %c0_14] : memref<128x256xf32, #tpu.memory_space<vmem>>, vector<128x256xf32>
    %cst_15 = arith.constant dense<0.000000e+00> : vector<8x256xf32>
    %15 = tpu.matmul %8, %14, %cst_15 {dimension_numbers = #tpu.dot_dimension_numbers<[1], [0], [0], [1], [0, 0, 1, 1], [], []>} : vector<8x128xf32>, vector<128x256xf32>, vector<8x256xf32> -> vector<8x256xf32>
    %c0_16 = arith.constant 0 : index
    %c0_17 = arith.constant 0 : index
    %16 = vector.load %arg8[%c0_16, %c0_17] : memref<1x256xf32, #tpu.memory_space<vmem>>, vector<1x256xf32>
    %17 = vector.broadcast %16 : vector<1x256xf32> to vector<8x256xf32>
    %18 = arith.addf %15, %17 : vector<8x256xf32>
    %19 = vector.extract_strided_slice %13 {offsets = [0, 0], sizes = [8, 128], strides = [1, 1]} : vector<8x384xf32> to vector<8x128xf32>
    %20 = vector.extract_strided_slice %18 {offsets = [0, 0], sizes = [8, 128], strides = [1, 1]} : vector<8x256xf32> to vector<8x128xf32>
    %21 = arith.addf %19, %20 : vector<8x128xf32>
    %22 = arith.negf %21 : vector<8x128xf32>
    %23 = math.exp %22 : vector<8x128xf32>
    %cst_18 = arith.constant 1.000000e+00 : f32
    %24 = vector.broadcast %cst_18 : f32 to vector<8x128xf32>
    %25 = arith.addf %24, %23 : vector<8x128xf32>
    %26 = arith.divf %24, %25 : vector<8x128xf32>
    %27 = vector.extract_strided_slice %13 {offsets = [0, 128], sizes = [8, 128], strides = [1, 1]} : vector<8x384xf32> to vector<8x128xf32>
    %28 = vector.extract_strided_slice %18 {offsets = [0, 128], sizes = [8, 128], strides = [1, 1]} : vector<8x256xf32> to vector<8x128xf32>
    %29 = arith.addf %27, %28 : vector<8x128xf32>
    %30 = arith.negf %29 : vector<8x128xf32>
    %31 = math.exp %30 : vector<8x128xf32>
    %cst_19 = arith.constant 1.000000e+00 : f32
    %32 = vector.broadcast %cst_19 : f32 to vector<8x128xf32>
    %33 = arith.addf %32, %31 : vector<8x128xf32>
    %34 = arith.divf %32, %33 : vector<8x128xf32>
    %35 = vector.extract_strided_slice %13 {offsets = [0, 256], sizes = [8, 128], strides = [1, 1]} : vector<8x384xf32> to vector<8x128xf32>
    %36 = arith.mulf %34, %8 : vector<8x128xf32>
    %c0_20 = arith.constant 0 : index
    %c0_21 = arith.constant 0 : index
    %37 = vector.load %arg9[%c0_20, %c0_21] : memref<128x128xf32, #tpu.memory_space<vmem>>, vector<128x128xf32>
    %cst_22 = arith.constant dense<0.000000e+00> : vector<8x128xf32>
    %38 = tpu.matmul %36, %37, %cst_22 {dimension_numbers = #tpu.dot_dimension_numbers<[1], [0], [0], [1], [0, 0, 1, 1], [], []>} : vector<8x128xf32>, vector<128x128xf32>, vector<8x128xf32> -> vector<8x128xf32>
    %39 = arith.addf %35, %38 : vector<8x128xf32>
    %c0_23 = arith.constant 0 : index
    %c0_24 = arith.constant 0 : index
    %40 = vector.load %arg10[%c0_23, %c0_24] : memref<1x128xf32, #tpu.memory_space<vmem>>, vector<1x128xf32>
    %41 = vector.broadcast %40 : vector<1x128xf32> to vector<8x128xf32>
    %42 = arith.addf %39, %41 : vector<8x128xf32>
    %43 = math.tanh %42 : vector<8x128xf32>
    %44 = arith.subf %8, %43 : vector<8x128xf32>
    %45 = arith.mulf %26, %44 : vector<8x128xf32>
    %46 = arith.addf %43, %45 : vector<8x128xf32>
    %c0_25 = arith.constant 0 : index
    %c0_26 = arith.constant 0 : index
    %47 = vector.load %arg11[%c0_25, %c0_26] : memref<128x128xf32, #tpu.memory_space<vmem>>, vector<128x128xf32>
    %cst_27 = arith.constant dense<0.000000e+00> : vector<8x128xf32>
    %48 = tpu.matmul %46, %47, %cst_27 {dimension_numbers = #tpu.dot_dimension_numbers<[1], [0], [0], [1], [0, 0, 1, 1], [], []>} : vector<8x128xf32>, vector<128x128xf32>, vector<8x128xf32> -> vector<8x128xf32>
    %c0_28 = arith.constant 0 : index
    %c0_29 = arith.constant 0 : index
    %49 = vector.load %arg12[%c0_28, %c0_29] : memref<1x128xf32, #tpu.memory_space<vmem>>, vector<1x128xf32>
    %50 = vector.broadcast %49 : vector<1x128xf32> to vector<8x128xf32>
    %51 = arith.addf %48, %50 : vector<8x128xf32>
    %c0_30 = arith.constant 0 : index
    %c0_31 = arith.constant 0 : index
    %52 = vector.load %arg13[%c0_30, %c0_31] : memref<8x128xf32, #tpu.memory_space<vmem>>, vector<8x128xf32>
    tpu.vector_store %arg13[%c0_30, %c0_31], %51 {strides = array<i32>} : memref<8x128xf32, #tpu.memory_space<vmem>>, vector<8x128xf32>,
    return
  }
  func.func @transform_0(%arg0: i32) -> (i32, i32) {
    %c0_i32 = arith.constant 0 : i32
    %c0_i32_0 = arith.constant 0 : i32
    return %arg0, %c0_i32 : i32, i32
  }
  func.func @transform_1(%arg0: i32) -> (i32, i32) {
    %c0_i32 = arith.constant 0 : i32
    %c0_i32_0 = arith.constant 0 : i32
    return %arg0, %c0_i32 : i32, i32
  }
  func.func @transform_2(%arg0: i32) -> (i32, i32) {
    %c0_i32 = arith.constant 0 : i32
    %c0_i32_0 = arith.constant 0 : i32
    %c0_i32_1 = arith.constant 0 : i32
    return %c0_i32, %c0_i32_0 : i32, i32
  }
  func.func @transform_3(%arg0: i32) -> (i32, i32) {
    %c0_i32 = arith.constant 0 : i32
    %c0_i32_0 = arith.constant 0 : i32
    %c0_i32_1 = arith.constant 0 : i32
    return %c0_i32, %c0_i32_0 : i32, i32
  }
  func.func @transform_4(%arg0: i32) -> (i32, i32) {
    %c0_i32 = arith.constant 0 : i32
    %c0_i32_0 = arith.constant 0 : i32
    %c0_i32_1 = arith.constant 0 : i32
    return %c0_i32, %c0_i32_0 : i32, i32
  }
  func.func @transform_5(%arg0: i32) -> (i32, i32) {
    %c0_i32 = arith.constant 0 : i32
    %c0_i32_0 = arith.constant 0 : i32
    %c0_i32_1 = arith.constant 0 : i32
    return %c0_i32, %c0_i32_0 : i32, i32
  }
  func.func @transform_6(%arg0: i32) -> (i32, i32) {
    %c0_i32 = arith.constant 0 : i32
    %c0_i32_0 = arith.constant 0 : i32
    %c0_i32_1 = arith.constant 0 : i32
    return %c0_i32, %c0_i32_0 : i32, i32
  }
  func.func @transform_7(%arg0: i32) -> (i32, i32) {
    %c0_i32 = arith.constant 0 : i32
    %c0_i32_0 = arith.constant 0 : i32
    %c0_i32_1 = arith.constant 0 : i32
    return %c0_i32, %c0_i32_0 : i32, i32
  }
  func.func @transform_8(%arg0: i32) -> (i32, i32) {
    %c0_i32 = arith.constant 0 : i32
    %c0_i32_0 = arith.constant 0 : i32
    %c0_i32_1 = arith.constant 0 : i32
    return %c0_i32, %c0_i32_0 : i32, i32
  }
  func.func @transform_9(%arg0: i32) -> (i32, i32) {
    %c0_i32 = arith.constant 0 : i32
    %c0_i32_0 = arith.constant 0 : i32
    %c0_i32_1 = arith.constant 0 : i32
    return %c0_i32, %c0_i32_0 : i32, i32
  }
  func.func @transform_10(%arg0: i32) -> (i32, i32) {
    %c0_i32 = arith.constant 0 : i32
    %c0_i32_0 = arith.constant 0 : i32
    %c0_i32_1 = arith.constant 0 : i32
    return %c0_i32, %c0_i32_0 : i32, i32
  }
  func.func @transform_11(%arg0: i32) -> (i32, i32) {
    %c0_i32 = arith.constant 0 : i32
    %c0_i32_0 = arith.constant 0 : i32
    %c0_i32_1 = arith.constant 0 : i32
    return %c0_i32, %c0_i32_0 : i32, i32
  }
  func.func @transform_12(%arg0: i32) -> (i32, i32) {
    %c0_i32 = arith.constant 0 : i32
    %c0_i32_0 = arith.constant 0 : i32
    return %arg0, %c0_i32 : i32, i32
  }
}

</mosaic_0001>

<llo_original>
// kernel: tpu_custom_call.1
$region0: #{tpu_custom_call.1}
  #allocation0 [shape = 'u32[]', space=smem, size = 0x4, offset = 0x4, fixed_abs, tag = 'smem constant byte address 0x4 - core index']
  #allocation1 [shape = 'u32[144,128]{1,0:T(1,128)}', space=vmem, size = 0x12000, scoped, tag = 'internal scratch']
  %s0 = inlined_call_operand.hbm [shape: f32[8,128], index: 0, kind: input, shape index: {}]
  %s1 = inlined_call_operand.hbm [shape: f32[8,128], index: 1, kind: input, shape index: {}]
  %s2 = inlined_call_operand.hbm [shape: f32[128,128], index: 2, kind: input, shape index: {}]
  %s3 = inlined_call_operand.hbm [shape: f32[1,128], index: 3, kind: input, shape index: {}]
  %s4 = inlined_call_operand.hbm [shape: f32[128,384], index: 4, kind: input, shape index: {}]
  %s5 = inlined_call_operand.vmem [shape: f32[1,384], index: 5, kind: input, shape index: {}]
  %s6 = inlined_call_operand.hbm [shape: f32[128,256], index: 6, kind: input, shape index: {}]
  %s7 = inlined_call_operand.vmem [shape: f32[1,256], index: 7, kind: input, shape index: {}]
  %s8 = inlined_call_operand.hbm [shape: f32[128,128], index: 8, kind: input, shape index: {}]
  %s9 = inlined_call_operand.vmem [shape: f32[1,128], index: 9, kind: input, shape index: {}]
  %s10 = inlined_call_operand.hbm [shape: f32[128,128], index: 10, kind: input, shape index: {}]
  %s11 = inlined_call_operand.vmem [shape: f32[1,128], index: 11, kind: input, shape index: {}]
  %s12 = inlined_call_operand.hbm [shape: f32[8,128], index: 12, kind: output, shape index: {}]
  %s13 = sld [smem:[#allocation0]]
  $region90: #{tpu_custom_call.1} parent=0
    _
  %s15 = ssub.s32 1, %s13
  %s16 = scalar_select 0, %s15, %s13
  $region1: #{tpu_custom_call.1} parent=0
    #allocation2 [shape = 'u8[4096]{0}', space=vmem, size = 0x1000, scoped, tag = 'input window, operand 0, single buffered']
    #allocation3 [shape = 's32[1]{0}', space=sflag, size = 0x4, scoped, tag = 'scoped memory for tpu_custom_call.1']
    #allocation4 [shape = 's32[1]{0}', space=sflag, size = 0x4, scoped, tag = 'scoped memory for tpu_custom_call.1']
    #allocation5 [shape = 'u8[4096]{0}', space=vmem, size = 0x1000, scoped, tag = 'input window, operand 1, single buffered']
    #allocation6 [shape = 's32[1]{0}', space=sflag, size = 0x4, scoped, tag = 'scoped memory for tpu_custom_call.1']
    #allocation7 [shape = 'u8[65536]{0}', space=vmem, size = 0x10000, scoped, tag = 'input window, operand 2, single buffered']
    #allocation8 [shape = 'u8[512]{0}', space=vmem, size = 0x400, scoped, tag = 'input window, operand 3, single buffered']
    #allocation9 [shape = 's32[1]{0}', space=sflag, size = 0x4, scoped, tag = 'scoped memory for tpu_custom_call.1']
    #allocation10 [shape = 'u8[196608]{0}', space=vmem, size = 0x30000, scoped, tag = 'input window, operand 4, single buffered']
    #allocation11 [shape = 'u8[131072]{0}', space=vmem, size = 0x20000, scoped, tag = 'input window, operand 6, single buffered']
    #allocation12 [shape = 's32[1]{0}', space=sflag, size = 0x4, scoped, tag = 'scoped memory for tpu_custom_call.1']
    #allocation13 [shape = 'u8[65536]{0}', space=vmem, size = 0x10000, scoped, tag = 'input window, operand 8, single buffered']
    #allocation14 [shape = 'u8[65536]{0}', space=vmem, size = 0x10000, scoped, tag = 'input window, operand 10, single buffered']
    #allocation15 [shape = 's32[1]{0}', space=sflag, size = 0x4, scoped, tag = 'scoped memory for tpu_custom_call.1']
    #allocation16 [shape = 'u8[4096]{0}', space=vmem, size = 0x1000, scoped, tag = 'output window, operand 0, single buffered']
    %17 = vsyncpa [#allocation3], 0
    %18 = vsyncpa [#allocation6], 0
    %19 = vsyncpa [#allocation9], 0
    %20 = vsyncpa [#allocation12], 0
    %21 = vsyncpa [#allocation15], 0
    %22 = vsyncpa [#allocation4], 0
    // Predicated region
    $region2: #{tpu_custom_call.1} parent=1 // pred_check
      _
    $region3: #{tpu_custom_call.1} parent=1 // pred_check_branch
      %24 = sbr.rel (0) target = $region5
    $region4: #{tpu_custom_call.1} parent=1 // pred_region
      %s26 = ssub.s32 128, 128
      %27 = vsyncadd [#allocation3], %s26
      %s29 = sshll.u32 [#allocation2], 4
      %s30 = int_to_ptr.vmem [resolvable:$true] %s29
      %32 = dma.hbm_to_vmem [thread:$0]  %s0, 128, %s30, [#allocation3]
    $region5: #{tpu_custom_call.1} parent=1 // pred_fallthru
      _
    // Predicated region
    $region6: #{tpu_custom_call.1} parent=1 // pred_check
      _
    $region7: #{tpu_custom_call.1} parent=1 // pred_check_branch
      %34 = sbr.rel (0) target = $region9
    $region8: #{tpu_custom_call.1} parent=1 // pred_region
      %s36 = ssub.s32 128, 128
      %37 = vsyncadd [#allocation6], %s36
      %s39 = sshll.u32 [#allocation5], 4
      %s40 = int_to_ptr.vmem [resolvable:$true] %s39
      %42 = dma.hbm_to_vmem [thread:$0]  %s1, 128, %s40, [#allocation6]
    $region9: #{tpu_custom_call.1} parent=1 // pred_fallthru
      _
    // Predicated region
    $region10: #{tpu_custom_call.1} parent=1 // pred_check
      _
    $region11: #{tpu_custom_call.1} parent=1 // pred_check_branch
      %44 = sbr.rel (0) target = $region13
    $region12: #{tpu_custom_call.1} parent=1 // pred_region
      %s46 = ssub.s32 2048, 2048
      %47 = vsyncadd [#allocation6], %s46
      %s48 = sshll.u32 [#allocation7], 4
      %s49 = int_to_ptr.vmem [resolvable:$true] %s48
      %54 = dma.hbm_to_vmem [thread:$0]  %s2, 2048, %s49, [#allocation6], 128, 128, 8
    $region13: #{tpu_custom_call.1} parent=1 // pred_fallthru
      _
    // Predicated region
    $region14: #{tpu_custom_call.1} parent=1 // pred_check
      _
    $region15: #{tpu_custom_call.1} parent=1 // pred_check_branch
      %56 = sbr.rel (0) target = $region17
    $region16: #{tpu_custom_call.1} parent=1 // pred_region
      %s58 = ssub.s32 16, 16
      %59 = vsyncadd [#allocation9], %s58
      %s61 = sshll.u32 [#allocation8], 4
      %s62 = int_to_ptr.vmem [resolvable:$true] %s61
      %64 = dma.hbm_to_vmem [thread:$0]  %s3, 16, %s62, [#allocation9]
    $region17: #{tpu_custom_call.1} parent=1 // pred_fallthru
      _
    // Predicated region
    $region18: #{tpu_custom_call.1} parent=1 // pred_check
      _
    $region19: #{tpu_custom_call.1} parent=1 // pred_check_branch
      %66 = sbr.rel (0) target = $region21
    $region20: #{tpu_custom_call.1} parent=1 // pred_region
      %s68 = ssub.s32 6144, 6144
      %69 = vsyncadd [#allocation9], %s68
      %s70 = sshll.u32 [#allocation10], 4
      %s71 = int_to_ptr.vmem [resolvable:$true] %s70
      %76 = dma.hbm_to_vmem [thread:$0]  %s4, 6144, %s71, [#allocation9], 384, 384, 24
    $region21: #{tpu_custom_call.1} parent=1 // pred_fallthru
      _
    // Predicated region
    $region22: #{tpu_custom_call.1} parent=1 // pred_check
      _
    $region23: #{tpu_custom_call.1} parent=1 // pred_check_branch
      %78 = sbr.rel (0) target = $region25
    $region24: #{tpu_custom_call.1} parent=1 // pred_region
      _
    $region25: #{tpu_custom_call.1} parent=1 // pred_fallthru
      _
    // Predicated region
    $region26: #{tpu_custom_call.1} parent=1 // pred_check
      _
    $region27: #{tpu_custom_call.1} parent=1 // pred_check_branch
      %80 = sbr.rel (0) target = $region29
    $region28: #{tpu_custom_call.1} parent=1 // pred_region
      %s82 = ssub.s32 4096, 4096
      %83 = vsyncadd [#allocation12], %s82
      %s84 = sshll.u32 [#allocation11], 4
      %s85 = int_to_ptr.vmem [resolvable:$true] %s84
      %90 = dma.hbm_to_vmem [thread:$0]  %s6, 4096, %s85, [#allocation12], 256, 256, 16
    $region29: #{tpu_custom_call.1} parent=1 // pred_fallthru
      _
    // Predicated region
    $region30: #{tpu_custom_call.1} parent=1 // pred_check
      _
    $region31: #{tpu_custom_call.1} parent=1 // pred_check_branch
      %92 = sbr.rel (0) target = $region33
    $region32: #{tpu_custom_call.1} parent=1 // pred_region
      _
    $region33: #{tpu_custom_call.1} parent=1 // pred_fallthru
      _
    // Predicated region
    $region34: #{tpu_custom_call.1} parent=1 // pred_check
      _
    $region35: #{tpu_custom_call.1} parent=1 // pred_check_branch
      %94 = sbr.rel (0) target = $region37
    $region36: #{tpu_custom_call.1} parent=1 // pred_region
      %s96 = ssub.s32 2048, 2048
      %97 = vsyncadd [#allocation12], %s96
      %s98 = sshll.u32 [#allocation13], 4
      %s99 = int_to_ptr.vmem [resolvable:$true] %s98
      %104 = dma.hbm_to_vmem [thread:$0]  %s8, 2048, %s99, [#allocation12], 128, 128, 8
    $region37: #{tpu_custom_call.1} parent=1 // pred_fallthru
      _
    // Predicated region
    $region38: #{tpu_custom_call.1} parent=1 // pred_check
      _
    $region39: #{tpu_custom_call.1} parent=1 // pred_check_branch
      %106 = sbr.rel (0) target = $region41
    $region40: #{tpu_custom_call.1} parent=1 // pred_region
      _
    $region41: #{tpu_custom_call.1} parent=1 // pred_fallthru
      _
    // Predicated region
    $region42: #{tpu_custom_call.1} parent=1 // pred_check
      _
    $region43: #{tpu_custom_call.1} parent=1 // pred_check_branch
      %108 = sbr.rel (0) target = $region45
    $region44: #{tpu_custom_call.1} parent=1 // pred_region
      %s110 = ssub.s32 2048, 2048
      %111 = vsyncadd [#allocation15], %s110
      %s112 = sshll.u32 [#allocation14], 4
      %s113 = int_to_ptr.vmem [resolvable:$true] %s112
      %118 = dma.hbm_to_vmem [thread:$0]  %s10, 2048, %s113, [#allocation15], 128, 128, 8
    $region45: #{tpu_custom_call.1} parent=1 // pred_fallthru
      _
    // Predicated region
    $region46: #{tpu_custom_call.1} parent=1 // pred_check
      _
    $region47: #{tpu_custom_call.1} parent=1 // pred_check_branch
      %120 = sbr.rel (0) target = $region49
    $region48: #{tpu_custom_call.1} parent=1 // pred_region
      _
    $region49: #{tpu_custom_call.1} parent=1 // pred_fallthru
      _
    // Predicated region
    $region50: #{tpu_custom_call.1} parent=1 // pred_check
      _
    $region51: #{tpu_custom_call.1} parent=1 // pred_check_branch
      %122 = sbr.rel (0) target = $region53
    $region52: #{tpu_custom_call.1} parent=1 // pred_region
      %123 = dma.done [#allocation3], 128
    $region53: #{tpu_custom_call.1} parent=1 // pred_fallthru
      _
    // Predicated region
    $region54: #{tpu_custom_call.1} parent=1 // pred_check
      _
    $region55: #{tpu_custom_call.1} parent=1 // pred_check_branch
      %125 = sbr.rel (0) target = $region57
    $region56: #{tpu_custom_call.1} parent=1 // pred_region
      %126 = dma.done [#allocation6], 128
    $region57: #{tpu_custom_call.1} parent=1 // pred_fallthru
      _
    // Predicated region
    $region58: #{tpu_custom_call.1} parent=1 // pred_check
      _
    $region59: #{tpu_custom_call.1} parent=1 // pred_check_branch
      %128 = sbr.rel (0) target = $region61
    $region60: #{tpu_custom_call.1} parent=1 // pred_region
      %129 = dma.done [#allocation6], 2048
    $region61: #{tpu_custom_call.1} parent=1 // pred_fallthru
      _
    // Predicated region
    $region62: #{tpu_custom_call.1} parent=1 // pred_check
      _
    $region63: #{tpu_custom_call.1} parent=1 // pred_check_branch
      %131 = sbr.rel (0) target = $region65
    $region64: #{tpu_custom_call.1} parent=1 // pred_region
      %132 = dma.done [#allocation9], 16
    $region65: #{tpu_custom_call.1} parent=1 // pred_fallthru
      _
    // Predicated region
    $region66: #{tpu_custom_call.1} parent=1 // pred_check
      _
    $region67: #{tpu_custom_call.1} parent=1 // pred_check_branch
      %134 = sbr.rel (0) target = $region69
    $region68: #{tpu_custom_call.1} parent=1 // pred_region
      %135 = dma.done [#allocation9], 6144
    $region69: #{tpu_custom_call.1} parent=1 // pred_fallthru
      _
    // Predicated region
    $region70: #{tpu_custom_call.1} parent=1 // pred_check
      _
    $region71: #{tpu_custom_call.1} parent=1 // pred_check_branch
      %137 = sbr.rel (0) target = $region73
    $region72: #{tpu_custom_call.1} parent=1 // pred_region
      %138 = dma.done [#allocation12], 4096
    $region73: #{tpu_custom_call.1} parent=1 // pred_fallthru
      _
    // Predicated region
    $region74: #{tpu_custom_call.1} parent=1 // pred_check
      _
    $region75: #{tpu_custom_call.1} parent=1 // pred_check_branch
      %140 = sbr.rel (0) target = $region77
    $region76: #{tpu_custom_call.1} parent=1 // pred_region
      %141 = dma.done [#allocation12], 2048
    $region77: #{tpu_custom_call.1} parent=1 // pred_fallthru
      _
    // Predicated region
    $region78: #{tpu_custom_call.1} parent=1 // pred_check
      _
    $region79: #{tpu_custom_call.1} parent=1 // pred_check_branch
      %143 = sbr.rel (0) target = $region81
    $region80: #{tpu_custom_call.1} parent=1 // pred_region
      %144 = dma.done [#allocation15], 2048
    $region81: #{tpu_custom_call.1} parent=1 // pred_fallthru
      _
    %v145 = vld [vmem:[#allocation7] sm:$0xff]
    %v146 = vld [vmem:[#allocation7 + $0x8] sm:$0xff]
    %v147 = vld [vmem:[#allocation7 + $0x10] sm:$0xff]
    %v148 = vld [vmem:[#allocation7 + $0x18] sm:$0xff]
    %v149 = vld [vmem:[#allocation7 + $0x20] sm:$0xff]
    %v150 = vld [vmem:[#allocation7 + $0x28] sm:$0xff]
    %v151 = vld [vmem:[#allocation7 + $0x30] sm:$0xff]
    %v152 = vld [vmem:[#allocation7 + $0x38] sm:$0xff]
    %v153 = vld [vmem:[#allocation7 + $0x40] sm:$0xff]
    %v154 = vld [vmem:[#allocation7 + $0x48] sm:$0xff]
    %v155 = vld [vmem:[#allocation7 + $0x50] sm:$0xff]
    %v156 = vld [vmem:[#allocation7 + $0x58] sm:$0xff]
    %v157 = vld [vmem:[#allocation7 + $0x60] sm:$0xff]
    %v158 = vld [vmem:[#allocation7 + $0x68] sm:$0xff]
    %v159 = vld [vmem:[#allocation7 + $0x70] sm:$0xff]
    %v160 = vld [vmem:[#allocation7 + $0x78] sm:$0xff]
    %v161 = vld [vmem:[#allocation2] sm:$0xff]
    %v162 = vld [vmem:[#allocation5] sm:$0xff]
    %v163 = vld [vmem:[#allocation8] sm:$0x1]
    %v165 = vlaneseq
    %v166 = vshrl.u32 %v165, 7
    %v167 = vsub.s32 0, %v166
    %v168 = vrot.slane %v163, %v167
    %170 = vmatprep.subr.mxu0 0.0
    %171 = vmatpush1.msra.mxu0 %v160
    %172 = vmatprep.subr.mxu0 0.0
    %173 = vmatpush1.msra.mxu0 %v159
    %174 = vmatprep.subr.mxu0 0.0
    %175 = vmatpush1.msra.mxu0 %v158
    %176 = vmatprep.subr.mxu0 0.0
    %177 = vmatpush1.msra.mxu0 %v157
    %178 = vmatprep.subr.mxu0 0.0
    %179 = vmatpush1.msra.mxu0 %v156
    %180 = vmatprep.subr.mxu0 0.0
    %181 = vmatpush1.msra.mxu0 %v155
    %182 = vmatprep.subr.mxu0 0.0
    %183 = vmatpush1.msra.mxu0 %v154
    %184 = vmatprep.subr.mxu0 0.0
    %185 = vmatpush1.msra.mxu0 %v153
    %186 = vmatprep.subr.mxu0 0.0
    %187 = vmatpush1.msra.mxu0 %v152
    %188 = vmatprep.subr.mxu0 0.0
    %189 = vmatpush1.msra.mxu0 %v151
    %190 = vmatprep.subr.mxu0 0.0
    %191 = vmatpush1.msra.mxu0 %v150
    %192 = vmatprep.subr.mxu0 0.0
    %193 = vmatpush1.msra.mxu0 %v149
    %194 = vmatprep.subr.mxu0 0.0
    %195 = vmatpush1.msra.mxu0 %v148
    %196 = vmatprep.subr.mxu0 0.0
    %197 = vmatpush1.msra.mxu0 %v147
    %198 = vmatprep.subr.mxu0 0.0
    %199 = vmatpush1.msra.mxu0 %v146
    %200 = vmatprep.subr.mxu0 0.0
    %201 = vmatpush1.msra.mxu0 %v145
    %202 = vmatprep.subr.mxu0 0.0
    %203 = vmatpush2.msra.mxu0 0.0
    %204 = vmatprep.subr.mxu0 0.0
    %205 = vmatpush2.msra.mxu0 0.0
    %206 = vmatprep.subr.mxu0 0.0
    %207 = vmatpush2.msra.mxu0 0.0
    %208 = vmatprep.subr.mxu0 0.0
    %209 = vmatpush2.msra.mxu0 0.0
    %210 = vmatprep.subr.mxu0 0.0
    %211 = vmatpush2.msra.mxu0 0.0
    %212 = vmatprep.subr.mxu0 0.0
    %213 = vmatpush2.msra.mxu0 0.0
    %214 = vmatprep.subr.mxu0 0.0
    %215 = vmatpush2.msra.mxu0 0.0
    %216 = vmatprep.subr.mxu0 0.0
    %217 = vmatpush2.msra.mxu0 0.0
    %218 = vmatprep.subr.mxu0 0.0
    %219 = vmatpush2.msra.mxu0 0.0
    %220 = vmatprep.subr.mxu0 0.0
    %221 = vmatpush2.msra.mxu0 0.0
    %222 = vmatprep.subr.mxu0 0.0
    %223 = vmatpush2.msra.mxu0 0.0
    %224 = vmatprep.subr.mxu0 0.0
    %225 = vmatpush2.msra.mxu0 0.0
    %226 = vmatprep.subr.mxu0 0.0
    %227 = vmatpush2.msra.mxu0 0.0
    %228 = vmatprep.subr.mxu0 0.0
    %229 = vmatpush2.msra.mxu0 0.0
    %230 = vmatprep.subr.mxu0 0.0
    %231 = vmatpush2.msra.mxu0 0.0
    %232 = vmatprep.subr.mxu0 0.0
    %233 = vmatpush2.msra.mxu0 0.0
    %234 = vmatprep.mubr.f32.mxu0 0.0
    %235 = vmatmul.mubr.f32.gmra.mxu0 %v162
    %v236 = vpop.f32.mrf.mxu0
    %v237 = vadd.f32 %v168, %v236
    %v238 = vpop.f32.mrf.mxu0
    %239 = vdwg.mxu0
    %v240 = vmax.f32 %v237, 0.0
    %v241 = vld [vmem:[#allocation10] sm:$0xff]
    %v242 = vld [vmem:[#allocation10 + $0x8] sm:$0xff]
    %v243 = vld [vmem:[#allocation10 + $0x10] sm:$0xff]
    %v244 = vld [vmem:[#allocation10 + $0x18] sm:$0xff]
    %v245 = vld [vmem:[#allocation10 + $0x20] sm:$0xff]
    %v246 = vld [vmem:[#allocation10 + $0x28] sm:$0xff]
    %v247 = vld [vmem:[#allocation10 + $0x30] sm:$0xff]
    %v248 = vld [vmem:[#allocation10 + $0x38] sm:$0xff]
    %v249 = vld [vmem:[#allocation10 + $0x40] sm:$0xff]
    %v250 = vld [vmem:[#allocation10 + $0x48] sm:$0xff]
    %v251 = vld [vmem:[#allocation10 + $0x50] sm:$0xff]
    %v252 = vld [vmem:[#allocation10 + $0x58] sm:$0xff]
    %v253 = vld [vmem:[#allocation10 + $0x60] sm:$0xff]
    %v254 = vld [vmem:[#allocation10 + $0x68] sm:$0xff]
    %v255 = vld [vmem:[#allocation10 + $0x70] sm:$0xff]
    %v256 = vld [vmem:[#allocation10 + $0x78] sm:$0xff]
    %v257 = vld [vmem:[#allocation10 + $0x80] sm:$0xff]
    %v258 = vld [vmem:[#allocation10 + $0x88] sm:$0xff]
    %v259 = vld [vmem:[#allocation10 + $0x90] sm:$0xff]
    %v260 = vld [vmem:[#allocation10 + $0x98] sm:$0xff]
    %v261 = vld [vmem:[#allocation10 + $0xa0] sm:$0xff]
    %v262 = vld [vmem:[#allocation10 + $0xa8] sm:$0xff]
    %v263 = vld [vmem:[#allocation10 + $0xb0] sm:$0xff]
    %v264 = vld [vmem:[#allocation10 + $0xb8] sm:$0xff]
    %v265 = vld [vmem:[#allocation10 + $0xc0] sm:$0xff]
    %v266 = vld [vmem:[#allocation10 + $0xc8] sm:$0xff]
    %v267 = vld [vmem:[#allocation10 + $0xd0] sm:$0xff]
    %v268 = vld [vmem:[#allocation10 + $0xd8] sm:$0xff]
    %v269 = vld [vmem:[#allocation10 + $0xe0] sm:$0xff]
    %v270 = vld [vmem:[#allocation10 + $0xe8] sm:$0xff]
    %v271 = vld [vmem:[#allocation10 + $0xf0] sm:$0xff]
    %v272 = vld [vmem:[#allocation10 + $0xf8] sm:$0xff]
    %v273 = vld [vmem:[#allocation10 + $0x100] sm:$0xff]
    %v274 = vld [vmem:[#allocation10 + $0x108] sm:$0xff]
    %v275 = vld [vmem:[#allocation10 + $0x110] sm:$0xff]
    %v276 = vld [vmem:[#allocation10 + $0x118] sm:$0xff]
    %v277 = vld [vmem:[#allocation10 + $0x120] sm:$0xff]
    %v278 = vld [vmem:[#allocation10 + $0x128] sm:$0xff]
    %v279 = vld [vmem:[#allocation10 + $0x130] sm:$0xff]
    %v280 = vld [vmem:[#allocation10 + $0x138] sm:$0xff]
    %v281 = vld [vmem:[#allocation10 + $0x140] sm:$0xff]
    %v282 = vld [vmem:[#allocation10 + $0x148] sm:$0xff]
    %v283 = vld [vmem:[#allocation10 + $0x150] sm:$0xff]
    %v284 = vld [vmem:[#allocation10 + $0x158] sm:$0xff]
    %v285 = vld [vmem:[#allocation10 + $0x160] sm:$0xff]
    %v286 = vld [vmem:[#allocation10 + $0x168] sm:$0xff]
    %v287 = vld [vmem:[#allocation10 + $0x170] sm:$0xff]
    %v288 = vld [vmem:[#allocation10 + $0x178] sm:$0xff]
    %v289 = vld [vmem:[%s5] sm:$0x7]
    %v291 = vlaneseq
    %v292 = vshrl.u32 %v291, 7
    %v293 = vsub.s32 0, %v292
    %v294 = vrot.slane %v289, %v293
    %v295 = vlaneseq
    %v296 = vshrl.u32 %v295, 7
    %v297 = vsub.s32 1, %v296
    %v298 = vrot.slane %v289, %v297
    %v299 = vlaneseq
    %v300 = vshrl.u32 %v299, 7
    %v301 = vsub.s32 2, %v300
    %v302 = vrot.slane %v289, %v301
    %306 = vmatprep.subr.mxu0 %v287
    %307 = vmatpush1.msra.mxu0 %v286
    %308 = vmatprep.subr.mxu0 %v284
    %309 = vmatpush1.msra.mxu0 %v283
    %310 = vmatprep.subr.mxu0 %v281
    %311 = vmatpush1.msra.mxu0 %v280
    %312 = vmatprep.subr.mxu0 %v278
    %313 = vmatpush1.msra.mxu0 %v277
    %314 = vmatprep.subr.mxu0 %v275
    %315 = vmatpush1.msra.mxu0 %v274
    %316 = vmatprep.subr.mxu0 %v272
    %317 = vmatpush1.msra.mxu0 %v271
    %318 = vmatprep.subr.mxu0 %v269
    %319 = vmatpush1.msra.mxu0 %v268
    %320 = vmatprep.subr.mxu0 %v266
    %321 = vmatpush1.msra.mxu0 %v265
    %322 = vmatprep.subr.mxu0 %v263
    %323 = vmatpush1.msra.mxu0 %v262
    %324 = vmatprep.subr.mxu0 %v260
    %325 = vmatpush1.msra.mxu0 %v259
    %326 = vmatprep.subr.mxu0 %v257
    %327 = vmatpush1.msra.mxu0 %v256
    %328 = vmatprep.subr.mxu0 %v254
    %329 = vmatpush1.msra.mxu0 %v253
    %330 = vmatprep.subr.mxu0 %v251
    %331 = vmatpush1.msra.mxu0 %v250
    %332 = vmatprep.subr.mxu0 %v248
    %333 = vmatpush1.msra.mxu0 %v247
    %334 = vmatprep.subr.mxu0 %v245
    %335 = vmatpush1.msra.mxu0 %v244
    %336 = vmatprep.subr.mxu0 %v242
    %337 = vmatpush1.msra.mxu0 %v241
    %338 = vmatprep.subr.mxu0 0.0
    %339 = vmatpush2.msra.mxu0 0.0
    %340 = vmatprep.subr.mxu0 0.0
    %341 = vmatpush2.msra.mxu0 0.0
    %342 = vmatprep.subr.mxu0 0.0
    %343 = vmatpush2.msra.mxu0 0.0
    %344 = vmatprep.subr.mxu0 0.0
    %345 = vmatpush2.msra.mxu0 0.0
    %346 = vmatprep.subr.mxu0 0.0
    %347 = vmatpush2.msra.mxu0 0.0
    %348 = vmatprep.subr.mxu0 0.0
    %349 = vmatpush2.msra.mxu0 0.0
    %350 = vmatprep.subr.mxu0 0.0
    %351 = vmatpush2.msra.mxu0 0.0
    %352 = vmatprep.subr.mxu0 0.0
    %353 = vmatpush2.msra.mxu0 0.0
    %354 = vmatprep.subr.mxu0 0.0
    %355 = vmatpush2.msra.mxu0 0.0
    %356 = vmatprep.subr.mxu0 0.0
    %357 = vmatpush2.msra.mxu0 0.0
    %358 = vmatprep.subr.mxu0 0.0
    %359 = vmatpush2.msra.mxu0 0.0
    %360 = vmatprep.subr.mxu0 0.0
    %361 = vmatpush2.msra.mxu0 0.0
    %362 = vmatprep.subr.mxu0 0.0
    %363 = vmatpush2.msra.mxu0 0.0
    %364 = vmatprep.subr.mxu0 0.0
    %365 = vmatpush2.msra.mxu0 0.0
    %366 = vmatprep.subr.mxu0 0.0
    %367 = vmatpush2.msra.mxu0 0.0
    %368 = vmatprep.subr.mxu0 0.0
    %369 = vmatpush2.msra.mxu0 0.0
    %370 = vmatprep.mubr.f32.mxu0 0.0
    %371 = vmatmul.mubr.f32.gmra.mxu0 %v161
    %v372 = vpop.f32.mrf.mxu0
    %v373 = vadd.f32 %v294, %v372
    %v374 = vpop.f32.mrf.mxu0
    %v375 = vadd.f32 %v298, %v374
    %376 = vdwg.mxu0
    %377 = vmatprep.subr.mxu0 0.0
    %378 = vmatpush1.msra.mxu0 %v288
    %379 = vmatprep.subr.mxu0 0.0
    %380 = vmatpush1.msra.mxu0 %v285
    %381 = vmatprep.subr.mxu0 0.0
    %382 = vmatpush1.msra.mxu0 %v282
    %383 = vmatprep.subr.mxu0 0.0
    %384 = vmatpush1.msra.mxu0 %v279
    %385 = vmatprep.subr.mxu0 0.0
    %386 = vmatpush1.msra.mxu0 %v276
    %387 = vmatprep.subr.mxu0 0.0
    %388 = vmatpush1.msra.mxu0 %v273
    %389 = vmatprep.subr.mxu0 0.0
    %390 = vmatpush1.msra.mxu0 %v270
    %391 = vmatprep.subr.mxu0 0.0
    %392 = vmatpush1.msra.mxu0 %v267
    %393 = vmatprep.subr.mxu0 0.0
    %394 = vmatpush1.msra.mxu0 %v264
    %395 = vmatprep.subr.mxu0 0.0
    %396 = vmatpush1.msra.mxu0 %v261
    %397 = vmatprep.subr.mxu0 0.0
    %398 = vmatpush1.msra.mxu0 %v258
    %399 = vmatprep.subr.mxu0 0.0
    %400 = vmatpush1.msra.mxu0 %v255
    %401 = vmatprep.subr.mxu0 0.0
    %402 = vmatpush1.msra.mxu0 %v252
    %403 = vmatprep.subr.mxu0 0.0
    %404 = vmatpush1.msra.mxu0 %v249
    %405 = vmatprep.subr.mxu0 0.0
    %406 = vmatpush1.msra.mxu0 %v246
    %407 = vmatprep.subr.mxu0 0.0
    %408 = vmatpush1.msra.mxu0 %v243
    %409 = vmatprep.subr.mxu0 0.0
    %410 = vmatpush2.msra.mxu0 0.0
    %411 = vmatprep.subr.mxu0 0.0
    %412 = vmatpush2.msra.mxu0 0.0
    %413 = vmatprep.subr.mxu0 0.0
    %414 = vmatpush2.msra.mxu0 0.0
    %415 = vmatprep.subr.mxu0 0.0
    %416 = vmatpush2.msra.mxu0 0.0
    %417 = vmatprep.subr.mxu0 0.0
    %418 = vmatpush2.msra.mxu0 0.0
    %419 = vmatprep.subr.mxu0 0.0
    %420 = vmatpush2.msra.mxu0 0.0
    %421 = vmatprep.subr.mxu0 0.0
    %422 = vmatpush2.msra.mxu0 0.0
    %423 = vmatprep.subr.mxu0 0.0
    %424 = vmatpush2.msra.mxu0 0.0
    %425 = vmatprep.subr.mxu0 0.0
    %426 = vmatpush2.msra.mxu0 0.0
    %427 = vmatprep.subr.mxu0 0.0
    %428 = vmatpush2.msra.mxu0 0.0
    %429 = vmatprep.subr.mxu0 0.0
    %430 = vmatpush2.msra.mxu0 0.0
    %431 = vmatprep.subr.mxu0 0.0
    %432 = vmatpush2.msra.mxu0 0.0
    %433 = vmatprep.subr.mxu0 0.0
    %434 = vmatpush2.msra.mxu0 0.0
    %435 = vmatprep.subr.mxu0 0.0
    %436 = vmatpush2.msra.mxu0 0.0
    %437 = vmatprep.subr.mxu0 0.0
    %438 = vmatpush2.msra.mxu0 0.0
    %439 = vmatprep.subr.mxu0 0.0
    %440 = vmatpush2.msra.mxu0 0.0
    %441 = vmatprep.mubr.f32.mxu0 0.0
    %442 = vmatmul.mubr.f32.gmra.mxu0 %v161
    %v443 = vpop.f32.mrf.mxu0
    %v444 = vadd.f32 %v302, %v443
    %v445 = vpop.f32.mrf.mxu0
    %446 = vdwg.mxu0
    %v447 = vld [vmem:[#allocation11] sm:$0xff]
    %v448 = vld [vmem:[#allocation11 + $0x8] sm:$0xff]
    %v449 = vld [vmem:[#allocation11 + $0x10] sm:$0xff]
    %v450 = vld [vmem:[#allocation11 + $0x18] sm:$0xff]
    %v451 = vld [vmem:[#allocation11 + $0x20] sm:$0xff]
    %v452 = vld [vmem:[#allocation11 + $0x28] sm:$0xff]
    %v453 = vld [vmem:[#allocation11 + $0x30] sm:$0xff]
    %v454 = vld [vmem:[#allocation11 + $0x38] sm:$0xff]
    %v455 = vld [vmem:[#allocation11 + $0x40] sm:$0xff]
    %v456 = vld [vmem:[#allocation11 + $0x48] sm:$0xff]
    %v457 = vld [vmem:[#allocation11 + $0x50] sm:$0xff]
    %v458 = vld [vmem:[#allocation11 + $0x58] sm:$0xff]
    %v459 = vld [vmem:[#allocation11 + $0x60] sm:$0xff]
    %v460 = vld [vmem:[#allocation11 + $0x68] sm:$0xff]
    %v461 = vld [vmem:[#allocation11 + $0x70] sm:$0xff]
    %v462 = vld [vmem:[#allocation11 + $0x78] sm:$0xff]
    %v463 = vld [vmem:[#allocation11 + $0x80] sm:$0xff]
    %v464 = vld [vmem:[#allocation11 + $0x88] sm:$0xff]
    %v465 = vld [vmem:[#allocation11 + $0x90] sm:$0xff]
    %v466 = vld [vmem:[#allocation11 + $0x98] sm:$0xff]
    %v467 = vld [vmem:[#allocation11 + $0xa0] sm:$0xff]
    %v468 = vld [vmem:[#allocation11 + $0xa8] sm:$0xff]
    %v469 = vld [vmem:[#allocation11 + $0xb0] sm:$0xff]
    %v470 = vld [vmem:[#allocation11 + $0xb8] sm:$0xff]
    %v471 = vld [vmem:[#allocation11 + $0xc0] sm:$0xff]
    %v472 = vld [vmem:[#allocation11 + $0xc8] sm:$0xff]
    %v473 = vld [vmem:[#allocation11 + $0xd0] sm:$0xff]
    %v474 = vld [vmem:[#allocation11 + $0xd8] sm:$0xff]
    %v475 = vld [vmem:[#allocation11 + $0xe0] sm:$0xff]
    %v476 = vld [vmem:[#allocation11 + $0xe8] sm:$0xff]
    %v477 = vld [vmem:[#allocation11 + $0xf0] sm:$0xff]
    %v478 = vld [vmem:[#allocation11 + $0xf8] sm:$0xff]
    %v479 = vld [vmem:[%s7] sm:$0x3]
    %v481 = vlaneseq
    %v482 = vshrl.u32 %v481, 7
    %v483 = vsub.s32 0, %v482
    %v484 = vrot.slane %v479, %v483
    %v485 = vlaneseq
    %v486 = vshrl.u32 %v485, 7
    %v487 = vsub.s32 1, %v486
    %v488 = vrot.slane %v479, %v487
    %491 = vmatprep.subr.mxu0 %v478
    %492 = vmatpush1.msra.mxu0 %v477
    %493 = vmatprep.subr.mxu0 %v476
    %494 = vmatpush1.msra.mxu0 %v475
    %495 = vmatprep.subr.mxu0 %v474
    %496 = vmatpush1.msra.mxu0 %v473
    %497 = vmatprep.subr.mxu0 %v472
    %498 = vmatpush1.msra.mxu0 %v471
    %499 = vmatprep.subr.mxu0 %v470
    %500 = vmatpush1.msra.mxu0 %v469
    %501 = vmatprep.subr.mxu0 %v468
    %502 = vmatpush1.msra.mxu0 %v467
    %503 = vmatprep.subr.mxu0 %v466
    %504 = vmatpush1.msra.mxu0 %v465
    %505 = vmatprep.subr.mxu0 %v464
    %506 = vmatpush1.msra.mxu0 %v463
    %507 = vmatprep.subr.mxu0 %v462
    %508 = vmatpush1.msra.mxu0 %v461
    %509 = vmatprep.subr.mxu0 %v460
    %510 = vmatpush1.msra.mxu0 %v459
    %511 = vmatprep.subr.mxu0 %v458
    %512 = vmatpush1.msra.mxu0 %v457
    %513 = vmatprep.subr.mxu0 %v456
    %514 = vmatpush1.msra.mxu0 %v455
    %515 = vmatprep.subr.mxu0 %v454
    %516 = vmatpush1.msra.mxu0 %v453
    %517 = vmatprep.subr.mxu0 %v452
    %518 = vmatpush1.msra.mxu0 %v451
    %519 = vmatprep.subr.mxu0 %v450
    %520 = vmatpush1.msra.mxu0 %v449
    %521 = vmatprep.subr.mxu0 %v448
    %522 = vmatpush1.msra.mxu0 %v447
    %523 = vmatprep.subr.mxu0 0.0
    %524 = vmatpush2.msra.mxu0 0.0
    %525 = vmatprep.subr.mxu0 0.0
    %526 = vmatpush2.msra.mxu0 0.0
    %527 = vmatprep.subr.mxu0 0.0
    %528 = vmatpush2.msra.mxu0 0.0
    %529 = vmatprep.subr.mxu0 0.0
    %530 = vmatpush2.msra.mxu0 0.0
    %531 = vmatprep.subr.mxu0 0.0
    %532 = vmatpush2.msra.mxu0 0.0
    %533 = vmatprep.subr.mxu0 0.0
    %534 = vmatpush2.msra.mxu0 0.0
    %535 = vmatprep.subr.mxu0 0.0
    %536 = vmatpush2.msra.mxu0 0.0
    %537 = vmatprep.subr.mxu0 0.0
    %538 = vmatpush2.msra.mxu0 0.0
    %539 = vmatprep.subr.mxu0 0.0
    %540 = vmatpush2.msra.mxu0 0.0
    %541 = vmatprep.subr.mxu0 0.0
    %542 = vmatpush2.msra.mxu0 0.0
    %543 = vmatprep.subr.mxu0 0.0
    %544 = vmatpush2.msra.mxu0 0.0
    %545 = vmatprep.subr.mxu0 0.0
    %546 = vmatpush2.msra.mxu0 0.0
    %547 = vmatprep.subr.mxu0 0.0
    %548 = vmatpush2.msra.mxu0 0.0
    %549 = vmatprep.subr.mxu0 0.0
    %550 = vmatpush2.msra.mxu0 0.0
    %551 = vmatprep.subr.mxu0 0.0
    %552 = vmatpush2.msra.mxu0 0.0
    %553 = vmatprep.subr.mxu0 0.0
    %554 = vmatpush2.msra.mxu0 0.0
    %555 = vmatprep.mubr.f32.mxu0 0.0
    %556 = vmatmul.mubr.f32.gmra.mxu0 %v240
    %v557 = vpop.f32.mrf.mxu0
    %v558 = vadd.f32 %v484, %v557
    %v559 = vpop.f32.mrf.mxu0
    %v560 = vadd.f32 %v488, %v559
    %561 = vdwg.mxu0
    %v562 = vadd.f32 %v373, %v558
    %v563 = vxor.u32 %v562, 2147483648
    %v564 = vmul.f32 %v563, 1.442695
    %v565 = vpow.pop %v564
    %v566 = vadd.f32 %v565, 1.0
    %v567 = vrcp.pop %v566
    %v568 = vmul.f32 1.0, %v567
    %v569 = vadd.f32 %v375, %v560
    %v570 = vxor.u32 %v569, 2147483648
    %v571 = vmul.f32 %v570, 1.442695
    %v572 = vpow.pop %v571
    %v573 = vadd.f32 %v572, 1.0
    %v574 = vrcp.pop %v573
    %v575 = vmul.f32 1.0, %v574
    %v576 = vmul.f32 %v575, %v240
    %v577 = vld [vmem:[#allocation13] sm:$0xff]
    %v578 = vld [vmem:[#allocation13 + $0x8] sm:$0xff]
    %v579 = vld [vmem:[#allocation13 + $0x10] sm:$0xff]
    %v580 = vld [vmem:[#allocation13 + $0x18] sm:$0xff]
    %v581 = vld [vmem:[#allocation13 + $0x20] sm:$0xff]
    %v582 = vld [vmem:[#allocation13 + $0x28] sm:$0xff]
    %v583 = vld [vmem:[#allocation13 + $0x30] sm:$0xff]
    %v584 = vld [vmem:[#allocation13 + $0x38] sm:$0xff]
    %v585 = vld [vmem:[#allocation13 + $0x40] sm:$0xff]
    %v586 = vld [vmem:[#allocation13 + $0x48] sm:$0xff]
    %v587 = vld [vmem:[#allocation13 + $0x50] sm:$0xff]
    %v588 = vld [vmem:[#allocation13 + $0x58] sm:$0xff]
    %v589 = vld [vmem:[#allocation13 + $0x60] sm:$0xff]
    %v590 = vld [vmem:[#allocation13 + $0x68] sm:$0xff]
    %v591 = vld [vmem:[#allocation13 + $0x70] sm:$0xff]
    %v592 = vld [vmem:[#allocation13 + $0x78] sm:$0xff]
    %593 = vmatprep.subr.mxu0 0.0
    %594 = vmatpush1.msra.mxu0 %v592
    %595 = vmatprep.subr.mxu0 0.0
    %596 = vmatpush1.msra.mxu0 %v591
    %597 = vmatprep.subr.mxu0 0.0
    %598 = vmatpush1.msra.mxu0 %v590
    %599 = vmatprep.subr.mxu0 0.0
    %600 = vmatpush1.msra.mxu0 %v589
    %601 = vmatprep.subr.mxu0 0.0
    %602 = vmatpush1.msra.mxu0 %v588
    %603 = vmatprep.subr.mxu0 0.0
    %604 = vmatpush1.msra.mxu0 %v587
    %605 = vmatprep.subr.mxu0 0.0
    %606 = vmatpush1.msra.mxu0 %v586
    %607 = vmatprep.subr.mxu0 0.0
    %608 = vmatpush1.msra.mxu0 %v585
    %609 = vmatprep.subr.mxu0 0.0
    %610 = vmatpush1.msra.mxu0 %v584
    %611 = vmatprep.subr.mxu0 0.0
    %612 = vmatpush1.msra.mxu0 %v583
    %613 = vmatprep.subr.mxu0 0.0
    %614 = vmatpush1.msra.mxu0 %v582
    %615 = vmatprep.subr.mxu0 0.0
    %616 = vmatpush1.msra.mxu0 %v581
    %617 = vmatprep.subr.mxu0 0.0
    %618 = vmatpush1.msra.mxu0 %v580
    %619 = vmatprep.subr.mxu0 0.0
    %620 = vmatpush1.msra.mxu0 %v579
    %621 = vmatprep.subr.mxu0 0.0
    %622 = vmatpush1.msra.mxu0 %v578
    %623 = vmatprep.subr.mxu0 0.0
    %624 = vmatpush1.msra.mxu0 %v577
    %625 = vmatprep.subr.mxu0 0.0
    %626 = vmatpush2.msra.mxu0 0.0
    %627 = vmatprep.subr.mxu0 0.0
    %628 = vmatpush2.msra.mxu0 0.0
    %629 = vmatprep.subr.mxu0 0.0
    %630 = vmatpush2.msra.mxu0 0.0
    %631 = vmatprep.subr.mxu0 0.0
    %632 = vmatpush2.msra.mxu0 0.0
    %633 = vmatprep.subr.mxu0 0.0
    %634 = vmatpush2.msra.mxu0 0.0
    %635 = vmatprep.subr.mxu0 0.0
    %636 = vmatpush2.msra.mxu0 0.0
    %637 = vmatprep.subr.mxu0 0.0
    %638 = vmatpush2.msra.mxu0 0.0
    %639 = vmatprep.subr.mxu0 0.0
    %640 = vmatpush2.msra.mxu0 0.0
    %641 = vmatprep.subr.mxu0 0.0
    %642 = vmatpush2.msra.mxu0 0.0
    %643 = vmatprep.subr.mxu0 0.0
    %644 = vmatpush2.msra.mxu0 0.0
    %645 = vmatprep.subr.mxu0 0.0
    %646 = vmatpush2.msra.mxu0 0.0
    %647 = vmatprep.subr.mxu0 0.0
    %648 = vmatpush2.msra.mxu0 0.0
    %649 = vmatprep.subr.mxu0 0.0
    %650 = vmatpush2.msra.mxu0 0.0
    %651 = vmatprep.subr.mxu0 0.0
    %652 = vmatpush2.msra.mxu0 0.0
    %653 = vmatprep.subr.mxu0 0.0
    %654 = vmatpush2.msra.mxu0 0.0
    %655 = vmatprep.subr.mxu0 0.0
    %656 = vmatpush2.msra.mxu0 0.0
    %657 = vmatprep.mubr.f32.mxu0 0.0
    %658 = vmatmul.mubr.f32.gmra.mxu0 %v576
    %v659 = vpop.f32.mrf.mxu0
    %v660 = vadd.f32 0.0, %v659
    %v661 = vpop.f32.mrf.mxu0
    %662 = vdwg.mxu0
    %v663 = vadd.f32 %v444, %v660
    %v664 = vld [vmem:[%s9] sm:$0x1]
    %v666 = vlaneseq
    %v667 = vshrl.u32 %v666, 7
    %v668 = vsub.s32 0, %v667
    %v669 = vrot.slane %v664, %v668
    %v671 = vadd.f32 %v663, %v669
    %v672 = vtanh.pop %v671
    %v673 = vsub.f32 %v240, %v672
    %v674 = vmul.f32 %v568, %v673
    %v675 = vadd.f32 %v672, %v674
    %v676 = vld [vmem:[#allocation14] sm:$0xff]
    %v677 = vld [vmem:[#allocation14 + $0x8] sm:$0xff]
    %v678 = vld [vmem:[#allocation14 + $0x10] sm:$0xff]
    %v679 = vld [vmem:[#allocation14 + $0x18] sm:$0xff]
    %v680 = vld [vmem:[#allocation14 + $0x20] sm:$0xff]
    %v681 = vld [vmem:[#allocation14 + $0x28] sm:$0xff]
    %v682 = vld [vmem:[#allocation14 + $0x30] sm:$0xff]
    %v683 = vld [vmem:[#allocation14 + $0x38] sm:$0xff]
    %v684 = vld [vmem:[#allocation14 + $0x40] sm:$0xff]
    %v685 = vld [vmem:[#allocation14 + $0x48] sm:$0xff]
    %v686 = vld [vmem:[#allocation14 + $0x50] sm:$0xff]
    %v687 = vld [vmem:[#allocation14 + $0x58] sm:$0xff]
    %v688 = vld [vmem:[#allocation14 + $0x60] sm:$0xff]
    %v689 = vld [vmem:[#allocation14 + $0x68] sm:$0xff]
    %v690 = vld [vmem:[#allocation14 + $0x70] sm:$0xff]
    %v691 = vld [vmem:[#allocation14 + $0x78] sm:$0xff]
    %v692 = vld [vmem:[%s11] sm:$0x1]
    %v694 = vlaneseq
    %v695 = vshrl.u32 %v694, 7
    %v696 = vsub.s32 0, %v695
    %v697 = vrot.slane %v692, %v696
    %699 = vmatprep.subr.mxu0 0.0
    %700 = vmatpush1.msra.mxu0 %v691
    %701 = vmatprep.subr.mxu0 0.0
    %702 = vmatpush1.msra.mxu0 %v690
    %703 = vmatprep.subr.mxu0 0.0
    %704 = vmatpush1.msra.mxu0 %v689
    %705 = vmatprep.subr.mxu0 0.0
    %706 = vmatpush1.msra.mxu0 %v688
    %707 = vmatprep.subr.mxu0 0.0
    %708 = vmatpush1.msra.mxu0 %v687
    %709 = vmatprep.subr.mxu0 0.0
    %710 = vmatpush1.msra.mxu0 %v686
    %711 = vmatprep.subr.mxu0 0.0
    %712 = vmatpush1.msra.mxu0 %v685
    %713 = vmatprep.subr.mxu0 0.0
    %714 = vmatpush1.msra.mxu0 %v684
    %715 = vmatprep.subr.mxu0 0.0
    %716 = vmatpush1.msra.mxu0 %v683
    %717 = vmatprep.subr.mxu0 0.0
    %718 = vmatpush1.msra.mxu0 %v682
    %719 = vmatprep.subr.mxu0 0.0
    %720 = vmatpush1.msra.mxu0 %v681
    %721 = vmatprep.subr.mxu0 0.0
    %722 = vmatpush1.msra.mxu0 %v680
    %723 = vmatprep.subr.mxu0 0.0
    %724 = vmatpush1.msra.mxu0 %v679
    %725 = vmatprep.subr.mxu0 0.0
    %726 = vmatpush1.msra.mxu0 %v678
    %727 = vmatprep.subr.mxu0 0.0
    %728 = vmatpush1.msra.mxu0 %v677
    %729 = vmatprep.subr.mxu0 0.0
    %730 = vmatpush1.msra.mxu0 %v676
    %731 = vmatprep.subr.mxu0 0.0
    %732 = vmatpush2.msra.mxu0 0.0
    %733 = vmatprep.subr.mxu0 0.0
    %734 = vmatpush2.msra.mxu0 0.0
    %735 = vmatprep.subr.mxu0 0.0
    %736 = vmatpush2.msra.mxu0 0.0
    %737 = vmatprep.subr.mxu0 0.0
    %738 = vmatpush2.msra.mxu0 0.0
    %739 = vmatprep.subr.mxu0 0.0
    %740 = vmatpush2.msra.mxu0 0.0
    %741 = vmatprep.subr.mxu0 0.0
    %742 = vmatpush2.msra.mxu0 0.0
    %743 = vmatprep.subr.mxu0 0.0
    %744 = vmatpush2.msra.mxu0 0.0
    %745 = vmatprep.subr.mxu0 0.0
    %746 = vmatpush2.msra.mxu0 0.0
    %747 = vmatprep.subr.mxu0 0.0
    %748 = vmatpush2.msra.mxu0 0.0
    %749 = vmatprep.subr.mxu0 0.0
    %750 = vmatpush2.msra.mxu0 0.0
    %751 = vmatprep.subr.mxu0 0.0
    %752 = vmatpush2.msra.mxu0 0.0
    %753 = vmatprep.subr.mxu0 0.0
    %754 = vmatpush2.msra.mxu0 0.0
    %755 = vmatprep.subr.mxu0 0.0
    %756 = vmatpush2.msra.mxu0 0.0
    %757 = vmatprep.subr.mxu0 0.0
    %758 = vmatpush2.msra.mxu0 0.0
    %759 = vmatprep.subr.mxu0 0.0
    %760 = vmatpush2.msra.mxu0 0.0
    %761 = vmatprep.subr.mxu0 0.0
    %762 = vmatpush2.msra.mxu0 0.0
    %763 = vmatprep.mubr.f32.mxu0 0.0
    %764 = vmatmul.mubr.f32.gmra.mxu0 %v675
    %v765 = vpop.f32.mrf.mxu0
    %v766 = vadd.f32 %v697, %v765
    %v767 = vpop.f32.mrf.mxu0
    %768 = vdwg.mxu0
    %769 = vst [vmem:[#allocation16] sm:$0xff] %v766
    // Predicated region
    $region82: #{tpu_custom_call.1} parent=1 // pred_check
      _
    $region83: #{tpu_custom_call.1} parent=1 // pred_check_branch
      %771 = sbr.rel (0) target = $region85
    $region84: #{tpu_custom_call.1} parent=1 // pred_region
      %s773 = ssub.s32 128, 128
      %774 = vsyncadd [#allocation4], %s773
      %s776 = sshll.u32 [#allocation16], 4
      %s777 = int_to_ptr.vmem [resolvable:$true] %s776
      %779 = dma.vmem_to_hbm [thread:$0]  %s777, 128, %s12, [#allocation4]
    $region85: #{tpu_custom_call.1} parent=1 // pred_fallthru
      _
    // Predicated region
    $region86: #{tpu_custom_call.1} parent=1 // pred_check
      _
    $region87: #{tpu_custom_call.1} parent=1 // pred_check_branch
      %781 = sbr.rel (0) target = $region89
    $region88: #{tpu_custom_call.1} parent=1 // pred_region
      %782 = dma.done [#allocation4], 128
    $region89: #{tpu_custom_call.1} parent=1 // pred_fallthru
      _
    %783 = vsyncpa [#allocation3], 1
    %784 = vsyncpa [#allocation6], 1
    %785 = vsyncpa [#allocation9], 1
    %786 = vsyncpa [#allocation12], 1
    %787 = vsyncpa [#allocation15], 1
    %788 = vsyncpa [#allocation4], 1

</llo_original>
